<compile_context>
chip_gen: v7x
topology: tpu7x:2x2x1
jax: 0.10.0
libtpu: 0.0.40
codegen_flags: <defaults>
</compile_context>

<pallas_src>
import functools

import jax
import jax.numpy as jnp
import numpy as np
from jax.experimental import pallas as pl
from jax.experimental.pallas import tpu as pltpu


def kbln_kernel(q_ref, ewt_ref, nhc_ref, ntt_ref, wnf_ref, out_ref, *, rbf_dtype):
    # score_l tile: (block_b, tile_e) = (block_b, D) @ (D, tile_e) -- natural MXU (K,N) RHS.
    score = jax.lax.dot_general(
        q_ref[...], ewt_ref[...],
        dimension_numbers=(((1,), (0,)), ((), ())),
        preferred_element_type=jnp.float32,
    )

    # RBF / score_n path: static loop over the (small) literal axis, lane-dense
    # (block_b, tile_e) vregs, no cross-lane reduce, f32 accumulation.
    # TODO(synk): set rbf_dtype=bf16 on v6e/v7x (bf16 VPU/EUP) to halve EUP work.
    nhc = nhc_ref[...].astype(rbf_dtype)     # (block_b, L)  already (n_h - c) * rsqrt(var)
    ntt = ntt_ref[...].astype(rbf_dtype)     # (L, tile_e)   already num_lit * rsqrt(var), transposed
    wnf = wnf_ref[...].astype(jnp.float32)   # (block_b, L)

    n_lit = nhc.shape[1]
    for l in range(n_lit):
        d = nhc[:, l:l + 1] - ntt[l:l + 1, :]          # (block_b, tile_e)
        phi = jnp.exp(-(d * d))                        # EUP exp only; no divide
        score = score + wnf[:, l:l + 1] * phi.astype(jnp.float32)

    out_ref[...] = jax.nn.sigmoid(score).astype(out_ref.dtype)


def _vmem_capacity_bytes():
    try:
        return int(pltpu.get_tpu_info().vmem_capacity_bytes)
    except Exception:
        return 64 * 1024 * 1024  # conservative (v7x per-TC VMEM)


def prepare_params(params, *, emb_dtype=jnp.bfloat16, lit_dtype=None):
    """One-time parameter prep: pre-transpose / pre-scale / pre-pad the full
    entity tables so the per-call forward path never re-reads them outside the
    kernel.  emb_dtype controls the streamed-table dtype (bf16 halves HBM)."""
    if lit_dtype is None:
        lit_dtype = emb_dtype
    emb_e = params["emb_e"].astype(jnp.float32)                  # (E, D)
    num_lit = params["numerical_literals"].astype(jnp.float32)   # (E, L)
    var = params["var"].astype(jnp.float32)                      # (L,)
    # NOTE: var must be strictly positive (same requirement as the reference divide).
    scale = jax.lax.rsqrt(var)                                   # (L,)

    E = emb_e.shape[0]
    E_pad = -(-E // 128) * 128

    emb_e_t = emb_e.T                                            # (D, E)
    nt_t = (num_lit * scale).T                                   # (L, E)
    if E_pad != E:
        pe = E_pad - E
        emb_e_t = jnp.pad(emb_e_t, ((0, 0), (0, pe)))
        nt_t = jnp.pad(nt_t, ((0, 0), (0, pe)))

    out = dict(params)
    out["emb_e_t"] = emb_e_t.astype(emb_dtype)                   # (D, E_pad)
    out["nt_scaled_t"] = nt_t.astype(lit_dtype)                  # (L, E_pad)
    out["lit_scale"] = scale
    return out


def kbln_forward(e1, rel, prepared, *, tile_e=2048, block_b=512,
                 rbf_dtype=jnp.float32, out_dtype=jnp.float32):
    emb_e = prepared["emb_e"]                    # (E, D)
    emb_rel = prepared["emb_rel"]                # (R, D)
    num_lit = prepared["numerical_literals"]     # (E, L)
    c = prepared["c"]                            # (L,)
    nf_w = prepared["nf_weights"]                # (R, L)
    emb_e_t = prepared["emb_e_t"]                # (D, E_pad)  pre-transposed (+padded)
    nt_t = prepared["nt_scaled_t"]               # (L, E_pad)  pre-scaled+transposed (+padded)
    scale = prepared["lit_scale"]                # (L,)

    emb_dtype = emb_e_t.dtype

    e1f = e1.reshape(-1)
    relf = rel.reshape(-1)

    # Glue: embedding lookups (gathers).  Dropout == identity (eval mode).
    q = emb_e[e1f].astype(jnp.float32) * emb_rel[relf].astype(jnp.float32)   # (B, D)
    n_h = num_lit[e1f].astype(jnp.float32)                                    # (B, L)
    w_nf = nf_w[relf].astype(jnp.float32)                                     # (B, L)

    B, D = q.shape
    E = emb_e.shape[0]
    L = num_lit.shape[1]
    E_pad = emb_e_t.shape[1]

    # Fold RBF params:  exp(-(n_h - n_t - c)^2 / var) == exp(-((n_h - c)*s - n_t*s)^2), s = rsqrt(var)
    nh_c = (n_h - c.astype(jnp.float32)) * scale                              # (B, L)

    q = q.astype(emb_dtype)

    # ---- Tiling (generation-aware VMEM budget) ------------------------------
    sz_emb = jnp.dtype(emb_dtype).itemsize
    sz_nt = jnp.dtype(nt_t.dtype).itemsize
    sz_out = jnp.dtype(out_dtype).itemsize

    B_pad8 = -(-B // 8) * 8
    blk_target = max(8, min(int(block_b), B_pad8))
    n_b = -(-B_pad8 // blk_target)                       # number of B blocks
    rows_per_block = -(-B_pad8 // n_b)
    blk_b = -(-rows_per_block // 8) * 8                  # per-block rows (multiple of 8)
    B_final = blk_b * n_b

    def vmem_bytes(te):
        per_buf = (blk_b * D * sz_emb      # q tile
                   + D * te * sz_emb       # emb_e^T tile
                   + blk_b * L * 4         # nh_c
                   + L * te * sz_nt        # nt^T tile
                   + blk_b * L * 4         # w_nf
                   + blk_b * te * sz_out)  # out tile
        return 2 * per_buf                 # double-buffered

    vmem_cap = _vmem_capacity_bytes()
    budget = int(vmem_cap * 0.6)

    # Pick tile_e: largest multiple-of-128 divisor of E_pad that is <= requested
    # tile_e and fits the VMEM budget (no wasted padded columns / wasted DMA).
    units = E_pad // 128
    target_units = max(1, min(int(tile_e), E_pad) // 128)
    best_units = 1
    for d_ in range(1, units + 1):
        if units % d_ == 0 and d_ <= target_units and vmem_bytes(d_ * 128) <= budget:
            best_units = max(best_units, d_)
    te = best_units * 128

    vmem_limit = int(min(vmem_cap * 0.9,
                         max(vmem_bytes(te) * 1.5 + (4 << 20), 32 << 20)))

    # ---- Padding of the small, per-call (batch-sized) arrays ----------------
    if B_final != B:
        pb = B_final - B
        q = jnp.pad(q, ((0, pb), (0, 0)))
        nh_c = jnp.pad(nh_c, ((0, pb), (0, 0)))
        w_nf = jnp.pad(w_nf, ((0, pb), (0, 0)))

    # ---- Pallas call: grid = (E tiles outer, B blocks inner) ----------------
    # Table tiles (emb_e^T, nt^T) depend only on the outer axis -> fetched once
    # per E tile and reused across all B blocks.
    # TODO(synk): if a trace shows exposed DMA on the ewt tile at very small B,
    # add pipeline_mode=pl.Buffered(3) to the ewt/ntt specs.
    kernel = functools.partial(kbln_kernel, rbf_dtype=rbf_dtype)
    out = pl.pallas_call(
        kernel,
        out_shape=jax.ShapeDtypeStruct((B_final, E_pad), out_dtype),
        grid_spec=pltpu.PrefetchScalarGridSpec(
            num_scalar_prefetch=0,
            grid=(E_pad // te, n_b),
            in_specs=[
                pl.BlockSpec((blk_b, D), lambda e, b: (b, 0)),   # q block
                pl.BlockSpec((D, te), lambda e, b: (0, e)),      # emb_e^T tile (K, N)
                pl.BlockSpec((blk_b, L), lambda e, b: (b, 0)),   # (n_h - c) * rsqrt(var)
                pl.BlockSpec((L, te), lambda e, b: (0, e)),      # scaled literal table tile
                pl.BlockSpec((blk_b, L), lambda e, b: (b, 0)),   # w_nf
            ],
            out_specs=pl.BlockSpec((blk_b, te), lambda e, b: (b, e)),
        ),
        compiler_params=pltpu.CompilerParams(
            dimension_semantics=("parallel", "parallel"),
            vmem_limit_bytes=vmem_limit,
        ),
    )(q, emb_e_t, nh_c, nt_t, w_nf)

    return out[:B, :E]


def kbln_reference(e1, rel, params):
    emb_e = params["emb_e"]
    emb_rel = params["emb_rel"]
    num_lit = params["numerical_literals"]
    c = params["c"]
    var = params["var"]
    nf_w = params["nf_weights"]

    e1f = e1.reshape(-1)
    relf = rel.reshape(-1)
    q = emb_e[e1f] * emb_rel[relf]                       # (B, D)
    score_l = q @ emb_e.T                                # (B, E)
    n_h = num_lit[e1f]                                   # (B, L)
    n = n_h[:, None, :] - num_lit[None, :, :]            # (B, E, L)
    phi = jnp.exp(-((n - c) ** 2) / var)                 # (B, E, L)
    w_nf = nf_w[relf]                                    # (B, L)
    score_n = jnp.einsum("bel,bl->be", phi, w_nf)        # (B, E)
    return jax.nn.sigmoid(score_l + score_n)


def make_params(key, num_entities, num_relations, emb_dim, n_num_lit):
    k1, k2, k3, k4, k5, k6 = jax.random.split(key, 6)
    emb_e = jax.random.normal(k1, (num_entities, emb_dim), jnp.float32) * 0.1
    emb_rel = jax.random.normal(k2, (num_relations, emb_dim), jnp.float32) * 0.1
    # padding_idx=0 -> row 0 is zero
    emb_e = emb_e.at[0].set(0.0)
    emb_rel = emb_rel.at[0].set(0.0)
    numerical_literals = jax.random.uniform(k3, (num_entities, n_num_lit), jnp.float32)
    c = jax.random.uniform(k4, (n_num_lit,), jnp.float32)
    var = jax.random.uniform(k5, (n_num_lit,), jnp.float32) + 0.5  # keep positive
    nf_weights = jax.random.normal(k6, (num_relations, n_num_lit), jnp.float32) * 0.1
    return {
        "emb_e": emb_e,
        "emb_rel": emb_rel,
        "numerical_literals": numerical_literals,
        "c": c,
        "var": var,
        "nf_weights": nf_weights,
    }


if __name__ == "__main__":
    num_entities = 256
    num_relations = 16
    emb_dim = 32
    n_num_lit = 8
    batch = 4

    key = jax.random.PRNGKey(0)
    kp, ke, kr = jax.random.split(key, 3)
    params = make_params(kp, num_entities, num_relations, emb_dim, n_num_lit)

    e1 = jax.random.randint(ke, (batch, 1), 0, num_entities, dtype=jnp.int32)
    rel = jax.random.randint(kr, (batch, 1), 0, num_relations, dtype=jnp.int32)

    ref = jax.block_until_ready(kbln_reference(e1, rel, params))

    # Exact-precision path (f32 streamed tables) -- tight tolerance.
    prepared_f32 = prepare_params(params, emb_dtype=jnp.float32)
    out_f32 = jax.block_until_ready(kbln_forward(e1, rel, prepared_f32))
    assert out_f32.shape == (batch, num_entities)
    np.testing.assert_allclose(np.asarray(out_f32), np.asarray(ref), rtol=5e-5, atol=5e-5)

    # Default (bf16-streamed tables) path -- halves the dominant HBM traffic;
    # looser tolerance since the MXU/RBF inputs are bf16-rounded.
    prepared_bf16 = prepare_params(params)  # emb_dtype defaults to bf16
    out_bf16 = jax.block_until_ready(kbln_forward(e1, rel, prepared_bf16))
    assert out_bf16.shape == (batch, num_entities)
    np.testing.assert_allclose(np.asarray(out_bf16), np.asarray(ref), rtol=2e-2, atol=2e-2)

    print("KERNEL_OK")
</pallas_src>

<mosaic_0001>
module attributes {stable_mosaic.version = 11 : i64} {
  func.func @kbln_kernel(%arg0: i32, %arg1: i32, %arg2: memref<8x32xf32, #tpu.memory_space<vmem>>, %arg3: memref<32x256xf32, #tpu.memory_space<vmem>>, %arg4: memref<8x8xf32, #tpu.memory_space<vmem>>, %arg5: memref<8x256xf32, #tpu.memory_space<vmem>>, %arg6: memref<8x8xf32, #tpu.memory_space<vmem>>, %arg7: memref<8x256xf32, #tpu.memory_space<vmem>>) attributes {dimension_semantics = [#tpu.dimension_semantics<parallel>, #tpu.dimension_semantics<parallel>], iteration_bounds = array<i64: 1, 1>, scalar_prefetch = 0 : i64, scratch_operands = 0 : i64, tpu.core_type = #tpu.core_type<tc>, window_params = [{transform_indices = @transform_0, window_bounds = array<i64: 8, 32>}, {transform_indices = @transform_1, window_bounds = array<i64: 32, 256>}, {transform_indices = @transform_2, window_bounds = array<i64: 8, 8>}, {transform_indices = @transform_3, window_bounds = array<i64: 8, 256>}, {transform_indices = @transform_4, window_bounds = array<i64: 8, 8>}, {transform_indices = @transform_5, window_bounds = array<i64: 8, 256>}]} {
    %c0 = arith.constant 0 : index
    %c0_0 = arith.constant 0 : index
    %0 = vector.load %arg2[%c0, %c0_0] : memref<8x32xf32, #tpu.memory_space<vmem>>, vector<8x32xf32>
    %c0_1 = arith.constant 0 : index
    %c0_2 = arith.constant 0 : index
    %1 = vector.load %arg3[%c0_1, %c0_2] : memref<32x256xf32, #tpu.memory_space<vmem>>, vector<32x256xf32>
    %cst = arith.constant dense<0.000000e+00> : vector<8x256xf32>
    %2 = tpu.matmul %0, %1, %cst {dimension_numbers = #tpu.dot_dimension_numbers<[1], [0], [0], [1], [0, 0, 1, 1], [], []>} : vector<8x32xf32>, vector<32x256xf32>, vector<8x256xf32> -> vector<8x256xf32>
    %c0_3 = arith.constant 0 : index
    %c0_4 = arith.constant 0 : index
    %3 = vector.load %arg4[%c0_3, %c0_4] : memref<8x8xf32, #tpu.memory_space<vmem>>, vector<8x8xf32>
    %c0_5 = arith.constant 0 : index
    %c0_6 = arith.constant 0 : index
    %4 = vector.load %arg5[%c0_5, %c0_6] : memref<8x256xf32, #tpu.memory_space<vmem>>, vector<8x256xf32>
    %c0_7 = arith.constant 0 : index
    %c0_8 = arith.constant 0 : index
    %5 = vector.load %arg6[%c0_7, %c0_8] : memref<8x8xf32, #tpu.memory_space<vmem>>, vector<8x8xf32>
    %6 = vector.extract_strided_slice %3 {offsets = [0, 0], sizes = [8, 1], strides = [1, 1]} : vector<8x8xf32> to vector<8x1xf32>
    %7 = vector.extract_strided_slice %4 {offsets = [0, 0], sizes = [1, 256], strides = [1, 1]} : vector<8x256xf32> to vector<1x256xf32>
    %8 = vector.broadcast %6 : vector<8x1xf32> to vector<8x256xf32>
    %9 = vector.broadcast %7 : vector<1x256xf32> to vector<8x256xf32>
    %10 = arith.subf %8, %9 : vector<8x256xf32>
    %11 = arith.mulf %10, %10 : vector<8x256xf32>
    %cst_9 = arith.constant 0.000000e+00 : f32
    %12 = vector.broadcast %cst_9 : f32 to vector<8x256xf32>
    %13 = arith.subf %12, %11 : vector<8x256xf32>
    %14 = math.exp %13 : vector<8x256xf32>
    %15 = vector.extract_strided_slice %5 {offsets = [0, 0], sizes = [8, 1], strides = [1, 1]} : vector<8x8xf32> to vector<8x1xf32>
    %16 = vector.broadcast %15 : vector<8x1xf32> to vector<8x256xf32>
    %17 = arith.mulf %16, %14 : vector<8x256xf32>
    %18 = arith.addf %2, %17 : vector<8x256xf32>
    %19 = vector.extract_strided_slice %3 {offsets = [0, 1], sizes = [8, 1], strides = [1, 1]} : vector<8x8xf32> to vector<8x1xf32>
    %20 = vector.extract_strided_slice %4 {offsets = [1, 0], sizes = [1, 256], strides = [1, 1]} : vector<8x256xf32> to vector<1x256xf32>
    %21 = vector.broadcast %19 : vector<8x1xf32> to vector<8x256xf32>
    %22 = vector.broadcast %20 : vector<1x256xf32> to vector<8x256xf32>
    %23 = arith.subf %21, %22 : vector<8x256xf32>
    %24 = arith.mulf %23, %23 : vector<8x256xf32>
    %cst_10 = arith.constant 0.000000e+00 : f32
    %25 = vector.broadcast %cst_10 : f32 to vector<8x256xf32>
    %26 = arith.subf %25, %24 : vector<8x256xf32>
    %27 = math.exp %26 : vector<8x256xf32>
    %28 = vector.extract_strided_slice %5 {offsets = [0, 1], sizes = [8, 1], strides = [1, 1]} : vector<8x8xf32> to vector<8x1xf32>
    %29 = vector.broadcast %28 : vector<8x1xf32> to vector<8x256xf32>
    %30 = arith.mulf %29, %27 : vector<8x256xf32>
    %31 = arith.addf %18, %30 : vector<8x256xf32>
    %32 = vector.extract_strided_slice %3 {offsets = [0, 2], sizes = [8, 1], strides = [1, 1]} : vector<8x8xf32> to vector<8x1xf32>
    %33 = vector.extract_strided_slice %4 {offsets = [2, 0], sizes = [1, 256], strides = [1, 1]} : vector<8x256xf32> to vector<1x256xf32>
    %34 = vector.broadcast %32 : vector<8x1xf32> to vector<8x256xf32>
    %35 = vector.broadcast %33 : vector<1x256xf32> to vector<8x256xf32>
    %36 = arith.subf %34, %35 : vector<8x256xf32>
    %37 = arith.mulf %36, %36 : vector<8x256xf32>
    %cst_11 = arith.constant 0.000000e+00 : f32
    %38 = vector.broadcast %cst_11 : f32 to vector<8x256xf32>
    %39 = arith.subf %38, %37 : vector<8x256xf32>
    %40 = math.exp %39 : vector<8x256xf32>
    %41 = vector.extract_strided_slice %5 {offsets = [0, 2], sizes = [8, 1], strides = [1, 1]} : vector<8x8xf32> to vector<8x1xf32>
    %42 = vector.broadcast %41 : vector<8x1xf32> to vector<8x256xf32>
    %43 = arith.mulf %42, %40 : vector<8x256xf32>
    %44 = arith.addf %31, %43 : vector<8x256xf32>
    %45 = vector.extract_strided_slice %3 {offsets = [0, 3], sizes = [8, 1], strides = [1, 1]} : vector<8x8xf32> to vector<8x1xf32>
    %46 = vector.extract_strided_slice %4 {offsets = [3, 0], sizes = [1, 256], strides = [1, 1]} : vector<8x256xf32> to vector<1x256xf32>
    %47 = vector.broadcast %45 : vector<8x1xf32> to vector<8x256xf32>
    %48 = vector.broadcast %46 : vector<1x256xf32> to vector<8x256xf32>
    %49 = arith.subf %47, %48 : vector<8x256xf32>
    %50 = arith.mulf %49, %49 : vector<8x256xf32>
    %cst_12 = arith.constant 0.000000e+00 : f32
    %51 = vector.broadcast %cst_12 : f32 to vector<8x256xf32>
    %52 = arith.subf %51, %50 : vector<8x256xf32>
    %53 = math.exp %52 : vector<8x256xf32>
    %54 = vector.extract_strided_slice %5 {offsets = [0, 3], sizes = [8, 1], strides = [1, 1]} : vector<8x8xf32> to vector<8x1xf32>
    %55 = vector.broadcast %54 : vector<8x1xf32> to vector<8x256xf32>
    %56 = arith.mulf %55, %53 : vector<8x256xf32>
    %57 = arith.addf %44, %56 : vector<8x256xf32>
    %58 = vector.extract_strided_slice %3 {offsets = [0, 4], sizes = [8, 1], strides = [1, 1]} : vector<8x8xf32> to vector<8x1xf32>
    %59 = vector.extract_strided_slice %4 {offsets = [4, 0], sizes = [1, 256], strides = [1, 1]} : vector<8x256xf32> to vector<1x256xf32>
    %60 = vector.broadcast %58 : vector<8x1xf32> to vector<8x256xf32>
    %61 = vector.broadcast %59 : vector<1x256xf32> to vector<8x256xf32>
    %62 = arith.subf %60, %61 : vector<8x256xf32>
    %63 = arith.mulf %62, %62 : vector<8x256xf32>
    %cst_13 = arith.constant 0.000000e+00 : f32
    %64 = vector.broadcast %cst_13 : f32 to vector<8x256xf32>
    %65 = arith.subf %64, %63 : vector<8x256xf32>
    %66 = math.exp %65 : vector<8x256xf32>
    %67 = vector.extract_strided_slice %5 {offsets = [0, 4], sizes = [8, 1], strides = [1, 1]} : vector<8x8xf32> to vector<8x1xf32>
    %68 = vector.broadcast %67 : vector<8x1xf32> to vector<8x256xf32>
    %69 = arith.mulf %68, %66 : vector<8x256xf32>
    %70 = arith.addf %57, %69 : vector<8x256xf32>
    %71 = vector.extract_strided_slice %3 {offsets = [0, 5], sizes = [8, 1], strides = [1, 1]} : vector<8x8xf32> to vector<8x1xf32>
    %72 = vector.extract_strided_slice %4 {offsets = [5, 0], sizes = [1, 256], strides = [1, 1]} : vector<8x256xf32> to vector<1x256xf32>
    %73 = vector.broadcast %71 : vector<8x1xf32> to vector<8x256xf32>
    %74 = vector.broadcast %72 : vector<1x256xf32> to vector<8x256xf32>
    %75 = arith.subf %73, %74 : vector<8x256xf32>
    %76 = arith.mulf %75, %75 : vector<8x256xf32>
    %cst_14 = arith.constant 0.000000e+00 : f32
    %77 = vector.broadcast %cst_14 : f32 to vector<8x256xf32>
    %78 = arith.subf %77, %76 : vector<8x256xf32>
    %79 = math.exp %78 : vector<8x256xf32>
    %80 = vector.extract_strided_slice %5 {offsets = [0, 5], sizes = [8, 1], strides = [1, 1]} : vector<8x8xf32> to vector<8x1xf32>
    %81 = vector.broadcast %80 : vector<8x1xf32> to vector<8x256xf32>
    %82 = arith.mulf %81, %79 : vector<8x256xf32>
    %83 = arith.addf %70, %82 : vector<8x256xf32>
    %84 = vector.extract_strided_slice %3 {offsets = [0, 6], sizes = [8, 1], strides = [1, 1]} : vector<8x8xf32> to vector<8x1xf32>
    %85 = vector.extract_strided_slice %4 {offsets = [6, 0], sizes = [1, 256], strides = [1, 1]} : vector<8x256xf32> to vector<1x256xf32>
    %86 = vector.broadcast %84 : vector<8x1xf32> to vector<8x256xf32>
    %87 = vector.broadcast %85 : vector<1x256xf32> to vector<8x256xf32>
    %88 = arith.subf %86, %87 : vector<8x256xf32>
    %89 = arith.mulf %88, %88 : vector<8x256xf32>
    %cst_15 = arith.constant 0.000000e+00 : f32
    %90 = vector.broadcast %cst_15 : f32 to vector<8x256xf32>
    %91 = arith.subf %90, %89 : vector<8x256xf32>
    %92 = math.exp %91 : vector<8x256xf32>
    %93 = vector.extract_strided_slice %5 {offsets = [0, 6], sizes = [8, 1], strides = [1, 1]} : vector<8x8xf32> to vector<8x1xf32>
    %94 = vector.broadcast %93 : vector<8x1xf32> to vector<8x256xf32>
    %95 = arith.mulf %94, %92 : vector<8x256xf32>
    %96 = arith.addf %83, %95 : vector<8x256xf32>
    %97 = vector.extract_strided_slice %3 {offsets = [0, 7], sizes = [8, 1], strides = [1, 1]} : vector<8x8xf32> to vector<8x1xf32>
    %98 = vector.extract_strided_slice %4 {offsets = [7, 0], sizes = [1, 256], strides = [1, 1]} : vector<8x256xf32> to vector<1x256xf32>
    %99 = vector.broadcast %97 : vector<8x1xf32> to vector<8x256xf32>
    %100 = vector.broadcast %98 : vector<1x256xf32> to vector<8x256xf32>
    %101 = arith.subf %99, %100 : vector<8x256xf32>
    %102 = arith.mulf %101, %101 : vector<8x256xf32>
    %cst_16 = arith.constant 0.000000e+00 : f32
    %103 = vector.broadcast %cst_16 : f32 to vector<8x256xf32>
    %104 = arith.subf %103, %102 : vector<8x256xf32>
    %105 = math.exp %104 : vector<8x256xf32>
    %106 = vector.extract_strided_slice %5 {offsets = [0, 7], sizes = [8, 1], strides = [1, 1]} : vector<8x8xf32> to vector<8x1xf32>
    %107 = vector.broadcast %106 : vector<8x1xf32> to vector<8x256xf32>
    %108 = arith.mulf %107, %105 : vector<8x256xf32>
    %109 = arith.addf %96, %108 : vector<8x256xf32>
    %110 = arith.negf %109 : vector<8x256xf32>
    %111 = math.exp %110 : vector<8x256xf32>
    %cst_17 = arith.constant 1.000000e+00 : f32
    %112 = vector.broadcast %cst_17 : f32 to vector<8x256xf32>
    %113 = arith.addf %112, %111 : vector<8x256xf32>
    %114 = arith.divf %112, %113 : vector<8x256xf32>
    %c0_18 = arith.constant 0 : index
    %c0_19 = arith.constant 0 : index
    %115 = vector.load %arg7[%c0_18, %c0_19] : memref<8x256xf32, #tpu.memory_space<vmem>>, vector<8x256xf32>
    tpu.vector_store %arg7[%c0_18, %c0_19], %114 {strides = array<i32>} : memref<8x256xf32, #tpu.memory_space<vmem>>, vector<8x256xf32>,
    return
  }
  func.func @transform_0(%arg0: i32, %arg1: i32) -> (i32, i32) {
    %c0_i32 = arith.constant 0 : i32
    %c0_i32_0 = arith.constant 0 : i32
    return %arg1, %c0_i32 : i32, i32
  }
  func.func @transform_1(%arg0: i32, %arg1: i32) -> (i32, i32) {
    %c0_i32 = arith.constant 0 : i32
    %c0_i32_0 = arith.constant 0 : i32
    return %c0_i32, %arg0 : i32, i32
  }
  func.func @transform_2(%arg0: i32, %arg1: i32) -> (i32, i32) {
    %c0_i32 = arith.constant 0 : i32
    %c0_i32_0 = arith.constant 0 : i32
    return %arg1, %c0_i32 : i32, i32
  }
  func.func @transform_3(%arg0: i32, %arg1: i32) -> (i32, i32) {
    %c0_i32 = arith.constant 0 : i32
    %c0_i32_0 = arith.constant 0 : i32
    return %c0_i32, %arg0 : i32, i32
  }
  func.func @transform_4(%arg0: i32, %arg1: i32) -> (i32, i32) {
    %c0_i32 = arith.constant 0 : i32
    %c0_i32_0 = arith.constant 0 : i32
    return %arg1, %c0_i32 : i32, i32
  }
  func.func @transform_5(%arg0: i32, %arg1: i32) -> (i32, i32) {
    %c0_i32 = arith.constant 0 : i32
    return %arg1, %arg0 : i32, i32
  }
}

</mosaic_0001>

<llo_original>
// kernel: tpu_custom_call.1
$region0: #{tpu_custom_call.1}
  #allocation0 [shape = 'u32[]', space=smem, size = 0x4, offset = 0x4, fixed_abs, tag = 'smem constant byte address 0x4 - core index']
  #allocation1 [shape = 'u32[144,128]{1,0:T(1,128)}', space=vmem, size = 0x12000, scoped, tag = 'internal scratch']
  %s0 = inlined_call_operand.hbm [shape: f32[8,32], index: 0, kind: input, shape index: {}]
  %s1 = inlined_call_operand.hbm [shape: f32[32,256], index: 1, kind: input, shape index: {}]
  %s2 = inlined_call_operand.hbm [shape: f32[8,8], index: 2, kind: input, shape index: {}]
  %s3 = inlined_call_operand.hbm [shape: f32[8,256], index: 3, kind: input, shape index: {}]
  %s4 = inlined_call_operand.vmem [shape: f32[8,8], index: 4, kind: input, shape index: {}]
  %s5 = inlined_call_operand.hbm [shape: f32[8,256], index: 5, kind: output, shape index: {}]
  %s6 = sld [smem:[#allocation0]]
  $region46: #{tpu_custom_call.1} parent=0
    _
  %s8 = ssub.s32 1, %s6
  %s9 = scalar_select 0, %s8, %s6
  $region1: #{tpu_custom_call.1} parent=0
    #allocation2 [shape = 'u8[4096]{0}', space=vmem, size = 0x1000, scoped, tag = 'input window, operand 0, single buffered']
    #allocation3 [shape = 's32[1]{0}', space=sflag, size = 0x4, scoped, tag = 'scoped memory for tpu_custom_call.1']
    #allocation4 [shape = 's32[1]{0}', space=sflag, size = 0x4, scoped, tag = 'scoped memory for tpu_custom_call.1']
    #allocation5 [shape = 'u8[32768]{0}', space=vmem, size = 0x8000, scoped, tag = 'input window, operand 1, single buffered']
    #allocation6 [shape = 's32[1]{0}', space=sflag, size = 0x4, scoped, tag = 'scoped memory for tpu_custom_call.1']
    #allocation7 [shape = 'u8[4096]{0}', space=vmem, size = 0x1000, scoped, tag = 'input window, operand 2, single buffered']
    #allocation8 [shape = 'u8[8192]{0}', space=vmem, size = 0x2000, scoped, tag = 'input window, operand 3, single buffered']
    #allocation9 [shape = 's32[1]{0}', space=sflag, size = 0x4, scoped, tag = 'scoped memory for tpu_custom_call.1']
    #allocation10 [shape = 'u8[8192]{0}', space=vmem, size = 0x2000, scoped, tag = 'output window, operand 0, single buffered']
    %10 = vsyncpa [#allocation3], 0
    %11 = vsyncpa [#allocation6], 0
    %12 = vsyncpa [#allocation9], 0
    %13 = vsyncpa [#allocation4], 0
    // Predicated region
    $region2: #{tpu_custom_call.1} parent=1 // pred_check
      _
    $region3: #{tpu_custom_call.1} parent=1 // pred_check_branch
      %15 = sbr.rel (0) target = $region5
    $region4: #{tpu_custom_call.1} parent=1 // pred_region
      %s17 = ssub.s32 128, 128
      %18 = vsyncadd [#allocation3], %s17
      %s20 = sshll.u32 [#allocation2], 4
      %s21 = int_to_ptr.vmem [resolvable:$true] %s20
      %23 = dma.hbm_to_vmem [thread:$0]  %s0, 128, %s21, [#allocation3]
    $region5: #{tpu_custom_call.1} parent=1 // pred_fallthru
      _
    // Predicated region
    $region6: #{tpu_custom_call.1} parent=1 // pred_check
      _
    $region7: #{tpu_custom_call.1} parent=1 // pred_check_branch
      %25 = sbr.rel (0) target = $region9
    $region8: #{tpu_custom_call.1} parent=1 // pred_region
      %s27 = ssub.s32 1024, 1024
      %28 = vsyncadd [#allocation6], %s27
      %s29 = sshll.u32 [#allocation5], 4
      %s30 = int_to_ptr.vmem [resolvable:$true] %s29
      %35 = dma.hbm_to_vmem [thread:$0]  %s1, 1024, %s30, [#allocation6], 256, 256, 16
    $region9: #{tpu_custom_call.1} parent=1 // pred_fallthru
      _
    // Predicated region
    $region10: #{tpu_custom_call.1} parent=1 // pred_check
      _
    $region11: #{tpu_custom_call.1} parent=1 // pred_check_branch
      %37 = sbr.rel (0) target = $region13
    $region12: #{tpu_custom_call.1} parent=1 // pred_region
      %s39 = ssub.s32 128, 128
      %40 = vsyncadd [#allocation6], %s39
      %s42 = sshll.u32 [#allocation7], 4
      %s43 = int_to_ptr.vmem [resolvable:$true] %s42
      %45 = dma.hbm_to_vmem [thread:$0]  %s2, 128, %s43, [#allocation6]
    $region13: #{tpu_custom_call.1} parent=1 // pred_fallthru
      _
    // Predicated region
    $region14: #{tpu_custom_call.1} parent=1 // pred_check
      _
    $region15: #{tpu_custom_call.1} parent=1 // pred_check_branch
      %47 = sbr.rel (0) target = $region17
    $region16: #{tpu_custom_call.1} parent=1 // pred_region
      %s49 = ssub.s32 256, 256
      %50 = vsyncadd [#allocation9], %s49
      %s52 = sshll.u32 [#allocation8], 4
      %s53 = int_to_ptr.vmem [resolvable:$true] %s52
      %55 = dma.hbm_to_vmem [thread:$0]  %s3, 256, %s53, [#allocation9]
    $region17: #{tpu_custom_call.1} parent=1 // pred_fallthru
      _
    // Predicated region
    $region18: #{tpu_custom_call.1} parent=1 // pred_check
      _
    $region19: #{tpu_custom_call.1} parent=1 // pred_check_branch
      %57 = sbr.rel (0) target = $region21
    $region20: #{tpu_custom_call.1} parent=1 // pred_region
      _
    $region21: #{tpu_custom_call.1} parent=1 // pred_fallthru
      _
    // Predicated region
    $region22: #{tpu_custom_call.1} parent=1 // pred_check
      _
    $region23: #{tpu_custom_call.1} parent=1 // pred_check_branch
      %59 = sbr.rel (0) target = $region25
    $region24: #{tpu_custom_call.1} parent=1 // pred_region
      %60 = dma.done [#allocation3], 128
    $region25: #{tpu_custom_call.1} parent=1 // pred_fallthru
      _
    // Predicated region
    $region26: #{tpu_custom_call.1} parent=1 // pred_check
      _
    $region27: #{tpu_custom_call.1} parent=1 // pred_check_branch
      %62 = sbr.rel (0) target = $region29
    $region28: #{tpu_custom_call.1} parent=1 // pred_region
      %63 = dma.done [#allocation6], 1024
    $region29: #{tpu_custom_call.1} parent=1 // pred_fallthru
      _
    // Predicated region
    $region30: #{tpu_custom_call.1} parent=1 // pred_check
      _
    $region31: #{tpu_custom_call.1} parent=1 // pred_check_branch
      %65 = sbr.rel (0) target = $region33
    $region32: #{tpu_custom_call.1} parent=1 // pred_region
      %66 = dma.done [#allocation6], 128
    $region33: #{tpu_custom_call.1} parent=1 // pred_fallthru
      _
    // Predicated region
    $region34: #{tpu_custom_call.1} parent=1 // pred_check
      _
    $region35: #{tpu_custom_call.1} parent=1 // pred_check_branch
      %68 = sbr.rel (0) target = $region37
    $region36: #{tpu_custom_call.1} parent=1 // pred_region
      %69 = dma.done [#allocation9], 256
    $region37: #{tpu_custom_call.1} parent=1 // pred_fallthru
      _
    %v70 = vld [vmem:[#allocation2] sm:$0xff]
    %v71 = vld [vmem:[#allocation5] sm:$0xff]
    %v72 = vld [vmem:[#allocation5 + $0x8] sm:$0xff]
    %v73 = vld [vmem:[#allocation5 + $0x10] sm:$0xff]
    %v74 = vld [vmem:[#allocation5 + $0x18] sm:$0xff]
    %v75 = vld [vmem:[#allocation5 + $0x20] sm:$0xff]
    %v76 = vld [vmem:[#allocation5 + $0x28] sm:$0xff]
    %v77 = vld [vmem:[#allocation5 + $0x30] sm:$0xff]
    %v78 = vld [vmem:[#allocation5 + $0x38] sm:$0xff]
    %v79 = vld [vmem:[#allocation7] sm:$0xff]
    %v80 = vld [vmem:[#allocation8] sm:$0xff]
    %v81 = vld [vmem:[#allocation8 + $0x8] sm:$0xff]
    %v82 = vld [vmem:[%s4] sm:$0xff]
    %84 = vset.pattern.permute.xlu0 0
    %85 = vperm.xlu0 %84, %v79
    %v86 = vpop.permute.xlu0 %85
    %v88 = vlaneseq
    %v89 = vshrl.u32 %v88, 7
    %v90 = vsub.s32 0, %v89
    %v91 = vrot.slane %v80, %v90
    %v92 = vlaneseq
    %v93 = vshrl.u32 %v92, 7
    %v94 = vsub.s32 0, %v93
    %v95 = vrot.slane %v81, %v94
    %v96 = vsub.f32 %v86, %v91
    %v97 = vsub.f32 %v86, %v95
    %v98 = vmul.f32 %v96, %v96
    %v99 = vmul.f32 %v97, %v97
    %v100 = vsub.f32 0.0, %v98
    %v101 = vsub.f32 0.0, %v99
    %v102 = vmul.f32 %v100, 1.442695
    %v103 = vpow.pop %v102
    %v104 = vmul.f32 %v101, 1.442695
    %v105 = vpow.pop %v104
    %107 = vset.pattern.permute.xlu0 0
    %108 = vperm.xlu0 %107, %v82
    %v109 = vpop.permute.xlu0 %108
    %v111 = vmul.f32 %v109, %v103
    %v112 = vmul.f32 %v109, %v105
    %vm113 = vcmask 261120
    %v115 = vsel %vm113, %v70, 0
    %117 = vmatprep.subr.mxu0 %v72
    %118 = vmatpush1.msra.mxu0 %v71
    %119 = vmatprep.subr.mxu0 %v74
    %120 = vmatpush1.msra.mxu0 %v73
    %121 = vmatprep.subr.mxu0 %v76
    %122 = vmatpush1.msra.mxu0 %v75
    %123 = vmatprep.subr.mxu0 %v78
    %124 = vmatpush1.msra.mxu0 %v77
    %125 = vmatprep.subr.mxu0 0.0
    %126 = vmatpush1.msra.mxu0 0.0
    %127 = vmatprep.subr.mxu0 0.0
    %128 = vmatpush1.msra.mxu0 0.0
    %129 = vmatprep.subr.mxu0 0.0
    %130 = vmatpush1.msra.mxu0 0.0
    %131 = vmatprep.subr.mxu0 0.0
    %132 = vmatpush1.msra.mxu0 0.0
    %133 = vmatprep.subr.mxu0 0.0
    %134 = vmatpush1.msra.mxu0 0.0
    %135 = vmatprep.subr.mxu0 0.0
    %136 = vmatpush1.msra.mxu0 0.0
    %137 = vmatprep.subr.mxu0 0.0
    %138 = vmatpush1.msra.mxu0 0.0
    %139 = vmatprep.subr.mxu0 0.0
    %140 = vmatpush1.msra.mxu0 0.0
    %141 = vmatprep.subr.mxu0 0.0
    %142 = vmatpush1.msra.mxu0 0.0
    %143 = vmatprep.subr.mxu0 0.0
    %144 = vmatpush1.msra.mxu0 0.0
    %145 = vmatprep.subr.mxu0 0.0
    %146 = vmatpush1.msra.mxu0 0.0
    %147 = vmatprep.subr.mxu0 0.0
    %148 = vmatpush1.msra.mxu0 0.0
    %149 = vmatprep.subr.mxu0 0.0
    %150 = vmatpush1.msra.mxu0 0.0
    %151 = vmatprep.subr.mxu0 0.0
    %152 = vmatpush1.msra.mxu0 0.0
    %153 = vmatprep.subr.mxu0 0.0
    %154 = vmatpush1.msra.mxu0 0.0
    %155 = vmatprep.subr.mxu0 0.0
    %156 = vmatpush1.msra.mxu0 0.0
    %157 = vmatprep.subr.mxu0 0.0
    %158 = vmatpush1.msra.mxu0 0.0
    %159 = vmatprep.subr.mxu0 0.0
    %160 = vmatpush1.msra.mxu0 0.0
    %161 = vmatprep.subr.mxu0 0.0
    %162 = vmatpush1.msra.mxu0 0.0
    %163 = vmatprep.subr.mxu0 0.0
    %164 = vmatpush1.msra.mxu0 0.0
    %165 = vmatprep.subr.mxu0 0.0
    %166 = vmatpush1.msra.mxu0 0.0
    %167 = vmatprep.subr.mxu0 0.0
    %168 = vmatpush1.msra.mxu0 0.0
    %169 = vmatprep.subr.mxu0 0.0
    %170 = vmatpush1.msra.mxu0 0.0
    %171 = vmatprep.subr.mxu0 0.0
    %172 = vmatpush1.msra.mxu0 0.0
    %173 = vmatprep.subr.mxu0 0.0
    %174 = vmatpush1.msra.mxu0 0.0
    %175 = vmatprep.subr.mxu0 0.0
    %176 = vmatpush1.msra.mxu0 0.0
    %177 = vmatprep.subr.mxu0 0.0
    %178 = vmatpush1.msra.mxu0 0.0
    %179 = vmatprep.subr.mxu0 0.0
    %180 = vmatpush1.msra.mxu0 0.0
    %181 = vmatprep.mubr.f32.mxu0 0.0
    %182 = vmatmul.mubr.f32.gmra.mrb[0].mxu0 %v115
    %v183 = vpop.f32.mrb[0].mxu0
    %v184 = vadd.f32 %v111, %v183
    %v185 = vpop.f32.mrb[0].mxu0
    %v186 = vadd.f32 %v112, %v185
    %187 = vdwg.mxu0
    %188 = vset.pattern.permute.xlu0 1
    %189 = vperm.xlu0 %188, %v79
    %v190 = vpop.permute.xlu0 %189
    %v192 = vlaneseq
    %v193 = vshrl.u32 %v192, 7
    %v194 = vsub.s32 1, %v193
    %v195 = vrot.slane %v80, %v194
    %v196 = vlaneseq
    %v197 = vshrl.u32 %v196, 7
    %v198 = vsub.s32 1, %v197
    %v199 = vrot.slane %v81, %v198
    %v200 = vsub.f32 %v190, %v195
    %v201 = vsub.f32 %v190, %v199
    %v202 = vmul.f32 %v200, %v200
    %v203 = vmul.f32 %v201, %v201
    %v204 = vsub.f32 0.0, %v202
    %v205 = vsub.f32 0.0, %v203
    %v206 = vmul.f32 %v204, 1.442695
    %v207 = vpow.pop %v206
    %v208 = vmul.f32 %v205, 1.442695
    %v209 = vpow.pop %v208
    %210 = vset.pattern.permute.xlu0 1
    %211 = vperm.xlu0 %210, %v82
    %v212 = vpop.permute.xlu0 %211
    %v214 = vmul.f32 %v212, %v207
    %v215 = vmul.f32 %v212, %v209
    %v216 = vadd.f32 %v184, %v214
    %v217 = vadd.f32 %v186, %v215
    %218 = vset.pattern.permute.xlu0 2
    %219 = vperm.xlu0 %218, %v79
    %v220 = vpop.permute.xlu0 %219
    %v222 = vlaneseq
    %v223 = vshrl.u32 %v222, 7
    %v224 = vsub.s32 2, %v223
    %v225 = vrot.slane %v80, %v224
    %v226 = vlaneseq
    %v227 = vshrl.u32 %v226, 7
    %v228 = vsub.s32 2, %v227
    %v229 = vrot.slane %v81, %v228
    %v230 = vsub.f32 %v220, %v225
    %v231 = vsub.f32 %v220, %v229
    %v232 = vmul.f32 %v230, %v230
    %v233 = vmul.f32 %v231, %v231
    %v234 = vsub.f32 0.0, %v232
    %v235 = vsub.f32 0.0, %v233
    %v236 = vmul.f32 %v234, 1.442695
    %v237 = vpow.pop %v236
    %v238 = vmul.f32 %v235, 1.442695
    %v239 = vpow.pop %v238
    %240 = vset.pattern.permute.xlu0 2
    %241 = vperm.xlu0 %240, %v82
    %v242 = vpop.permute.xlu0 %241
    %v244 = vmul.f32 %v242, %v237
    %v245 = vmul.f32 %v242, %v239
    %v246 = vadd.f32 %v216, %v244
    %v247 = vadd.f32 %v217, %v245
    %248 = vset.pattern.permute.xlu0 3
    %249 = vperm.xlu0 %248, %v79
    %v250 = vpop.permute.xlu0 %249
    %v252 = vlaneseq
    %v253 = vshrl.u32 %v252, 7
    %v254 = vsub.s32 3, %v253
    %v255 = vrot.slane %v80, %v254
    %v256 = vlaneseq
    %v257 = vshrl.u32 %v256, 7
    %v258 = vsub.s32 3, %v257
    %v259 = vrot.slane %v81, %v258
    %v260 = vsub.f32 %v250, %v255
    %v261 = vsub.f32 %v250, %v259
    %v262 = vmul.f32 %v260, %v260
    %v263 = vmul.f32 %v261, %v261
    %v264 = vsub.f32 0.0, %v262
    %v265 = vsub.f32 0.0, %v263
    %v266 = vmul.f32 %v264, 1.442695
    %v267 = vpow.pop %v266
    %v268 = vmul.f32 %v265, 1.442695
    %v269 = vpow.pop %v268
    %270 = vset.pattern.permute.xlu0 3
    %271 = vperm.xlu0 %270, %v82
    %v272 = vpop.permute.xlu0 %271
    %v274 = vmul.f32 %v272, %v267
    %v275 = vmul.f32 %v272, %v269
    %v276 = vadd.f32 %v246, %v274
    %v277 = vadd.f32 %v247, %v275
    %278 = vset.pattern.permute.xlu0 4
    %279 = vperm.xlu0 %278, %v79
    %v280 = vpop.permute.xlu0 %279
    %v282 = vlaneseq
    %v283 = vshrl.u32 %v282, 7
    %v284 = vsub.s32 4, %v283
    %v285 = vrot.slane %v80, %v284
    %v286 = vlaneseq
    %v287 = vshrl.u32 %v286, 7
    %v288 = vsub.s32 4, %v287
    %v289 = vrot.slane %v81, %v288
    %v290 = vsub.f32 %v280, %v285
    %v291 = vsub.f32 %v280, %v289
    %v292 = vmul.f32 %v290, %v290
    %v293 = vmul.f32 %v291, %v291
    %v294 = vsub.f32 0.0, %v292
    %v295 = vsub.f32 0.0, %v293
    %v296 = vmul.f32 %v294, 1.442695
    %v297 = vpow.pop %v296
    %v298 = vmul.f32 %v295, 1.442695
    %v299 = vpow.pop %v298
    %300 = vset.pattern.permute.xlu0 4
    %301 = vperm.xlu0 %300, %v82
    %v302 = vpop.permute.xlu0 %301
    %v304 = vmul.f32 %v302, %v297
    %v305 = vmul.f32 %v302, %v299
    %v306 = vadd.f32 %v276, %v304
    %v307 = vadd.f32 %v277, %v305
    %308 = vset.pattern.permute.xlu0 5
    %309 = vperm.xlu0 %308, %v79
    %v310 = vpop.permute.xlu0 %309
    %v312 = vlaneseq
    %v313 = vshrl.u32 %v312, 7
    %v314 = vsub.s32 5, %v313
    %v315 = vrot.slane %v80, %v314
    %v316 = vlaneseq
    %v317 = vshrl.u32 %v316, 7
    %v318 = vsub.s32 5, %v317
    %v319 = vrot.slane %v81, %v318
    %v320 = vsub.f32 %v310, %v315
    %v321 = vsub.f32 %v310, %v319
    %v322 = vmul.f32 %v320, %v320
    %v323 = vmul.f32 %v321, %v321
    %v324 = vsub.f32 0.0, %v322
    %v325 = vsub.f32 0.0, %v323
    %v326 = vmul.f32 %v324, 1.442695
    %v327 = vpow.pop %v326
    %v328 = vmul.f32 %v325, 1.442695
    %v329 = vpow.pop %v328
    %330 = vset.pattern.permute.xlu0 5
    %331 = vperm.xlu0 %330, %v82
    %v332 = vpop.permute.xlu0 %331
    %v334 = vmul.f32 %v332, %v327
    %v335 = vmul.f32 %v332, %v329
    %v336 = vadd.f32 %v306, %v334
    %v337 = vadd.f32 %v307, %v335
    %338 = vset.pattern.permute.xlu0 6
    %339 = vperm.xlu0 %338, %v79
    %v340 = vpop.permute.xlu0 %339
    %v342 = vlaneseq
    %v343 = vshrl.u32 %v342, 7
    %v344 = vsub.s32 6, %v343
    %v345 = vrot.slane %v80, %v344
    %v346 = vlaneseq
    %v347 = vshrl.u32 %v346, 7
    %v348 = vsub.s32 6, %v347
    %v349 = vrot.slane %v81, %v348
    %v350 = vsub.f32 %v340, %v345
    %v351 = vsub.f32 %v340, %v349
    %v352 = vmul.f32 %v350, %v350
    %v353 = vmul.f32 %v351, %v351
    %v354 = vsub.f32 0.0, %v352
    %v355 = vsub.f32 0.0, %v353
    %v356 = vmul.f32 %v354, 1.442695
    %v357 = vpow.pop %v356
    %v358 = vmul.f32 %v355, 1.442695
    %v359 = vpow.pop %v358
    %360 = vset.pattern.permute.xlu0 6
    %361 = vperm.xlu0 %360, %v82
    %v362 = vpop.permute.xlu0 %361
    %v364 = vmul.f32 %v362, %v357
    %v365 = vmul.f32 %v362, %v359
    %v366 = vadd.f32 %v336, %v364
    %v367 = vadd.f32 %v337, %v365
    %368 = vset.pattern.permute.xlu0 7
    %369 = vperm.xlu0 %368, %v79
    %v370 = vpop.permute.xlu0 %369
    %v372 = vlaneseq
    %v373 = vshrl.u32 %v372, 7
    %v374 = vsub.s32 7, %v373
    %v375 = vrot.slane %v80, %v374
    %v376 = vlaneseq
    %v377 = vshrl.u32 %v376, 7
    %v378 = vsub.s32 7, %v377
    %v379 = vrot.slane %v81, %v378
    %v380 = vsub.f32 %v370, %v375
    %v381 = vsub.f32 %v370, %v379
    %v382 = vmul.f32 %v380, %v380
    %v383 = vmul.f32 %v381, %v381
    %v384 = vsub.f32 0.0, %v382
    %v385 = vsub.f32 0.0, %v383
    %v386 = vmul.f32 %v384, 1.442695
    %v387 = vpow.pop %v386
    %v388 = vmul.f32 %v385, 1.442695
    %v389 = vpow.pop %v388
    %390 = vset.pattern.permute.xlu0 7
    %391 = vperm.xlu0 %390, %v82
    %v392 = vpop.permute.xlu0 %391
    %v394 = vmul.f32 %v392, %v387
    %v395 = vmul.f32 %v392, %v389
    %v396 = vadd.f32 %v366, %v394
    %v397 = vadd.f32 %v367, %v395
    %v398 = vxor.u32 %v396, 2147483648
    %v399 = vxor.u32 %v397, 2147483648
    %v400 = vmul.f32 %v398, 1.442695
    %v401 = vpow.pop %v400
    %v402 = vmul.f32 %v399, 1.442695
    %v403 = vpow.pop %v402
    %v404 = vadd.f32 %v401, 1.0
    %v405 = vadd.f32 %v403, 1.0
    %v406 = vrcp.pop %v404
    %v407 = vmul.f32 1.0, %v406
    %v408 = vrcp.pop %v405
    %v409 = vmul.f32 1.0, %v408
    %410 = vst [vmem:[#allocation10] sm:$0xff] %v407
    %411 = vst [vmem:[#allocation10 + $0x8] sm:$0xff] %v409
    // Predicated region
    $region38: #{tpu_custom_call.1} parent=1 // pred_check
      _
    $region39: #{tpu_custom_call.1} parent=1 // pred_check_branch
      %413 = sbr.rel (0) target = $region41
    $region40: #{tpu_custom_call.1} parent=1 // pred_region
      %s415 = ssub.s32 256, 256
      %416 = vsyncadd [#allocation4], %s415
      %s418 = sshll.u32 [#allocation10], 4
      %s419 = int_to_ptr.vmem [resolvable:$true] %s418
      %421 = dma.vmem_to_hbm [thread:$0]  %s419, 256, %s5, [#allocation4]
    $region41: #{tpu_custom_call.1} parent=1 // pred_fallthru
      _
    // Predicated region
    $region42: #{tpu_custom_call.1} parent=1 // pred_check
      _
    $region43: #{tpu_custom_call.1} parent=1 // pred_check_branch
      %423 = sbr.rel (0) target = $region45
    $region44: #{tpu_custom_call.1} parent=1 // pred_region
      %424 = dma.done [#allocation4], 256
    $region45: #{tpu_custom_call.1} parent=1 // pred_fallthru
      _
    %425 = vsyncpa [#allocation3], 1
    %426 = vsyncpa [#allocation6], 1
    %427 = vsyncpa [#allocation9], 1
    %428 = vsyncpa [#allocation4], 1

</llo_original>
